<compile_context>
chip_gen: v7x
topology: tpu7x:2x2x1
jax: 0.10.0
libtpu: 0.0.40
codegen_flags: <defaults>
</compile_context>

<pallas_src>
import functools
import math

import jax
import jax.numpy as jnp
from jax.experimental import pallas as pl
from jax.experimental.pallas import tpu as pltpu


def _round_up(x: int, m: int) -> int:
    return ((x + m - 1) // m) * m


def _ft_kernel(xc_ref, xn_ref, wc_ref, wn_ref, b_ref, o_ref, *, compute_dtype):
    # Two lane-dense MXU matmuls + one VPU bias add.  Inputs are cast to the
    # compute dtype in-register (free), never via an extra HBM pass.
    xc = xc_ref[...].astype(compute_dtype)
    xn = xn_ref[...].astype(compute_dtype)
    acc = jnp.dot(xc, wc_ref[...], preferred_element_type=jnp.float32)
    acc = acc + jnp.dot(xn, wn_ref[...], preferred_element_type=jnp.float32)
    o_ref[...] = (acc + b_ref[...]).astype(o_ref.dtype)


def build_fused_params(weight_num, w_cat_list, bias, categories, d_token,
                       compute_dtype):
    """Fuse the per-category linears / numerical weights / bias / CLS token.

    Returns:
      w_cat:  (dim_cat, n_tokens*d_token) block-diagonal categorical weight
      w_num:  (d_num,   n_tokens*d_token) per-feature numerical weight
      b_flat: (1,       n_tokens*d_token) f32 bias slab; the CLS slot holds
              weight_num[-1] (CLS token value; its bias row is zero in the
              reference).
    Token order: [cat_0..cat_{n-1}, num_0..num_{d-1}, CLS].
    """
    n_cat = len(categories)
    dim_cat = sum(categories)
    d_num = weight_num.shape[0] - 1          # last row of weight_num is CLS
    n_tokens = n_cat + d_num + 1
    F = n_tokens * d_token

    w_cat = jnp.zeros((dim_cat, F), dtype=jnp.float32)
    off = 0
    for j, c in enumerate(categories):
        w_cat = w_cat.at[off:off + c, j * d_token:(j + 1) * d_token].set(
            w_cat_list[j].T.astype(jnp.float32))
        off += c

    w_num = jnp.zeros((d_num, F), dtype=jnp.float32)
    for k in range(d_num):
        tok = n_cat + k
        w_num = w_num.at[k, tok * d_token:(tok + 1) * d_token].set(
            weight_num[k].astype(jnp.float32))

    b_flat = jnp.concatenate(
        [bias.astype(jnp.float32), weight_num[-1:].astype(jnp.float32)],
        axis=0).reshape(1, F)
    return w_cat.astype(compute_dtype), w_num.astype(compute_dtype), b_flat


def _vmem_capacity_bytes() -> int:
    cap = 64 * 1024 * 1024        # conservative fallback (v7x per-TC VMEM)
    try:
        info = pltpu.get_tpu_info()
        cap = int(getattr(info, "vmem_capacity_bytes", cap))
    except Exception:
        pass
    return cap


def feature_tokenizer(x_num, x_cat, weight_num, w_cat_list, bias, categories,
                      d_token, *, bm=512, compute_dtype=jnp.bfloat16,
                      out_dtype=None):
    # TODO(synk): the empty-categories / no-numerical branches of the PyTorch
    # forward are not wired up here (the test config exercises both present).
    assert len(categories) > 0 and x_num.shape[-1] > 0
    if out_dtype is None:
        out_dtype = compute_dtype
    out_dtype = jnp.dtype(out_dtype)

    B, d_num = x_num.shape
    n_cat = len(categories)
    dim_cat = sum(categories)
    assert x_cat.shape == (B, dim_cat)
    n_tokens = n_cat + d_num + 1
    F = n_tokens * d_token

    w_cat, w_num, b_flat = build_fused_params(
        weight_num, w_cat_list, bias, categories, d_token, compute_dtype)

    # ---- batch-tile sizing -------------------------------------------------
    out_isz = out_dtype.itemsize
    row_align = 8 * max(1, 4 // out_isz)            # 8 for f32, 16 for bf16
    w_isz = jnp.dtype(compute_dtype).itemsize

    vmem_cap = _vmem_capacity_bytes()
    budget = (3 * vmem_cap) // 4                    # sizing budget (~75%)

    # Resident once (single-buffered): fused weights + bias slab.
    w_resident = (dim_cat + d_num) * F * w_isz + F * 4
    # Per batch-row, double-buffered: input blocks (HBM dtype) + output block.
    per_row = 2 * (dim_cat * x_cat.dtype.itemsize
                   + d_num * x_num.dtype.itemsize
                   + F * out_isz)
    bm_budget = max(row_align, (budget - w_resident) // max(per_row, 1))

    # Guarantee >=2 grid steps (when B allows) so the "parallel" batch axis
    # shards across both v7x TensorCores; harmless on 1-TC v5e/v6e.
    bm_two_step = max(row_align, _round_up(pl.cdiv(B, 2), row_align))

    bm_eff = min(int(bm), int(bm_budget), int(bm_two_step))
    bm_eff = max(row_align, (bm_eff // row_align) * row_align)
    grid = (pl.cdiv(B, bm_eff),)                    # edge block is masked

    needed = w_resident + bm_eff * per_row
    vmem_limit = int(min((17 * vmem_cap) // 20,      # ~0.85 * capacity
                         max(32 * 1024 * 1024, 2 * needed)))
    vmem_limit = max(vmem_limit, min(needed + (2 << 20), vmem_cap))

    # ---- pallas call -------------------------------------------------------
    kernel = functools.partial(_ft_kernel, compute_dtype=compute_dtype)

    def call(single_buffer_consts: bool):
        const_kw = ({"pipeline_mode": pl.Buffered(1)}
                    if single_buffer_consts else {})
        grid_spec = pltpu.PrefetchScalarGridSpec(
            num_scalar_prefetch=0,
            grid=grid,
            in_specs=[
                pl.BlockSpec((bm_eff, dim_cat), lambda i: (i, 0)),
                pl.BlockSpec((bm_eff, d_num), lambda i: (i, 0)),
                pl.BlockSpec((dim_cat, F), lambda i: (0, 0), **const_kw),
                pl.BlockSpec((d_num, F), lambda i: (0, 0), **const_kw),
                pl.BlockSpec((1, F), lambda i: (0, 0), **const_kw),
            ],
            out_specs=pl.BlockSpec((bm_eff, F), lambda i: (i, 0)),
        )
        return pl.pallas_call(
            kernel,
            out_shape=jax.ShapeDtypeStruct((B, F), out_dtype),
            grid_spec=grid_spec,
            compiler_params=pltpu.CompilerParams(
                dimension_semantics=("parallel",),
                vmem_limit_bytes=int(vmem_limit)),
        )(x_cat, x_num, w_cat, w_num, b_flat)

    try:
        out_flat = call(True)
    except Exception:
        # TODO(synk): drop this fallback once pl.Buffered(1) single-buffering
        # of grid-invariant operands is confirmed on the deployed jax version.
        out_flat = call(False)

    return out_flat.reshape(B, n_tokens, d_token)


def kaiming_uniform(key, shape, fan_in):
    # torch.nn.init.kaiming_uniform_(a=sqrt(5)) -> bound = 1/sqrt(fan_in)
    bound = 1.0 / math.sqrt(fan_in)
    return jax.random.uniform(key, shape, minval=-bound, maxval=bound,
                              dtype=jnp.float32)


def reference_jax(x_num, x_cat, weight_num, w_cat_list, bias, categories,
                  d_token):
    """Pure-JAX re-implementation of the PyTorch forward (for validation)."""
    B = x_num.shape[0]
    x_num_cls = jnp.concatenate(
        [x_num, jnp.ones((B, 1), x_num.dtype)], axis=-1)
    x = weight_num[None] * x_num_cls[..., None]
    cat_toks, off = [], 0
    for j, c in enumerate(categories):
        cat_toks.append(x_cat[:, off:off + c] @ w_cat_list[j].T)
        off += c
    cat_toks = jnp.stack(cat_toks, axis=-2)
    x = jnp.concatenate([cat_toks, x], axis=-2)
    bias_full = jnp.concatenate(
        [bias, jnp.zeros((1, d_token), bias.dtype)], axis=0)
    return x + bias_full[None]


if __name__ == "__main__":
    # Small shapes implied by forward(): flattened (bs*sq) rows.
    bs, sq = 2, 16
    B = bs * sq                         # 32 rows -> two grid steps at bm=16
    d_numerical = 5
    categories = [3, 5, 4]
    n_cat = len(categories)
    dim_cat = sum(categories)           # 12
    d_token = 16
    d_bias = d_numerical + n_cat        # 8
    n_tokens = n_cat + d_numerical + 1  # 9 (incl. CLS)

    key = jax.random.PRNGKey(0)
    k_num, k_cat, k_wnum, k_bias, *k_wcat = jax.random.split(key, 4 + n_cat)

    # inputs
    x_num = jax.random.normal(k_num, (B, d_numerical), dtype=jnp.float32)
    cat_blocks = []
    for j, c in enumerate(categories):
        idx = jax.random.randint(jax.random.fold_in(k_cat, j), (B,), 0, c)
        cat_blocks.append(jax.nn.one_hot(idx, c, dtype=jnp.float32))
    x_cat = jnp.concatenate(cat_blocks, axis=-1)            # (B, dim_cat)

    # parameters (deterministic init, shapes from __init__)
    weight_num = kaiming_uniform(k_wnum, (d_numerical + 1, d_token),
                                 fan_in=d_token)
    bias = kaiming_uniform(k_bias, (d_bias, d_token), fan_in=d_token)
    w_cat_list = [kaiming_uniform(k_wcat[j], (d_token, c), fan_in=c)
                  for j, c in enumerate(categories)]

    ref = reference_jax(x_num, x_cat, weight_num, w_cat_list, bias,
                        categories, d_token)

    # Exact-arithmetic check (f32 operands, f32 output).
    out_f32 = feature_tokenizer(x_num, x_cat, weight_num, w_cat_list, bias,
                                categories, d_token,
                                compute_dtype=jnp.float32,
                                out_dtype=jnp.float32)
    out_f32 = jax.block_until_ready(out_f32)
    assert out_f32.shape == (B, n_tokens, d_token), out_f32.shape
    assert out_f32.dtype == jnp.float32, out_f32.dtype
    assert jnp.allclose(out_f32, ref, atol=1e-5, rtol=1e-5), \
        float(jnp.max(jnp.abs(out_f32 - ref)))

    # Fast default path (bf16 MXU operands + bf16 writeback) — looser check.
    out_bf16 = feature_tokenizer(x_num, x_cat, weight_num, w_cat_list, bias,
                                 categories, d_token)
    out_bf16 = jax.block_until_ready(out_bf16)
    assert out_bf16.shape == (B, n_tokens, d_token), out_bf16.shape
    assert out_bf16.dtype == jnp.bfloat16, out_bf16.dtype
    err = out_bf16.astype(jnp.float32) - ref
    assert jnp.allclose(out_bf16.astype(jnp.float32), ref,
                        atol=2e-2, rtol=2e-2), float(jnp.max(jnp.abs(err)))

    print("KERNEL_OK")
</pallas_src>

<mosaic_0001>
module attributes {stable_mosaic.version = 11 : i64} {
  func.func @_ft_kernel(%arg0: i32, %arg1: memref<16x12xf32, #tpu.memory_space<vmem>>, %arg2: memref<16x5xf32, #tpu.memory_space<vmem>>, %arg3: memref<12x144xf32, #tpu.memory_space<vmem>>, %arg4: memref<5x144xf32, #tpu.memory_space<vmem>>, %arg5: memref<1x144xf32, #tpu.memory_space<vmem>>, %arg6: memref<16x144xf32, #tpu.memory_space<vmem>>) attributes {dimension_semantics = [#tpu.dimension_semantics<parallel>], iteration_bounds = array<i64: 2>, scalar_prefetch = 0 : i64, scratch_operands = 0 : i64, tpu.core_type = #tpu.core_type<tc>, window_params = [{transform_indices = @transform_0, window_bounds = array<i64: 16, 12>}, {transform_indices = @transform_1, window_bounds = array<i64: 16, 5>}, {pipeline_mode = #tpu.pipeline_mode<synchronous>, transform_indices = @transform_2, window_bounds = array<i64: 12, 144>}, {pipeline_mode = #tpu.pipeline_mode<synchronous>, transform_indices = @transform_3, window_bounds = array<i64: 5, 144>}, {pipeline_mode = #tpu.pipeline_mode<synchronous>, transform_indices = @transform_4, window_bounds = array<i64: 1, 144>}, {transform_indices = @transform_5, window_bounds = array<i64: 16, 144>}]} {
    %c0 = arith.constant 0 : index
    %c0_0 = arith.constant 0 : index
    %0 = vector.load %arg1[%c0, %c0_0] : memref<16x12xf32, #tpu.memory_space<vmem>>, vector<16x12xf32>
    %c0_1 = arith.constant 0 : index
    %c0_2 = arith.constant 0 : index
    %1 = vector.load %arg2[%c0_1, %c0_2] : memref<16x5xf32, #tpu.memory_space<vmem>>, vector<16x5xf32>
    %c0_3 = arith.constant 0 : index
    %c0_4 = arith.constant 0 : index
    %2 = vector.load %arg3[%c0_3, %c0_4] : memref<12x144xf32, #tpu.memory_space<vmem>>, vector<12x144xf32>
    %cst = arith.constant dense<0.000000e+00> : vector<16x144xf32>
    %3 = tpu.matmul %0, %2, %cst {dimension_numbers = #tpu.dot_dimension_numbers<[1], [0], [0], [1], [0, 0, 1, 1], [], []>} : vector<16x12xf32>, vector<12x144xf32>, vector<16x144xf32> -> vector<16x144xf32>
    %c0_5 = arith.constant 0 : index
    %c0_6 = arith.constant 0 : index
    %4 = vector.load %arg4[%c0_5, %c0_6] : memref<5x144xf32, #tpu.memory_space<vmem>>, vector<5x144xf32>
    %cst_7 = arith.constant dense<0.000000e+00> : vector<16x144xf32>
    %5 = tpu.matmul %1, %4, %cst_7 {dimension_numbers = #tpu.dot_dimension_numbers<[1], [0], [0], [1], [0, 0, 1, 1], [], []>} : vector<16x5xf32>, vector<5x144xf32>, vector<16x144xf32> -> vector<16x144xf32>
    %6 = arith.addf %3, %5 : vector<16x144xf32>
    %c0_8 = arith.constant 0 : index
    %c0_9 = arith.constant 0 : index
    %7 = vector.load %arg5[%c0_8, %c0_9] : memref<1x144xf32, #tpu.memory_space<vmem>>, vector<1x144xf32>
    %8 = vector.broadcast %7 : vector<1x144xf32> to vector<16x144xf32>
    %9 = arith.addf %6, %8 : vector<16x144xf32>
    %c0_10 = arith.constant 0 : index
    %c0_11 = arith.constant 0 : index
    %10 = vector.load %arg6[%c0_10, %c0_11] : memref<16x144xf32, #tpu.memory_space<vmem>>, vector<16x144xf32>
    tpu.vector_store %arg6[%c0_10, %c0_11], %9 {strides = array<i32>} : memref<16x144xf32, #tpu.memory_space<vmem>>, vector<16x144xf32>,
    return
  }
  func.func @transform_0(%arg0: i32) -> (i32, i32) {
    %c0_i32 = arith.constant 0 : i32
    %c0_i32_0 = arith.constant 0 : i32
    return %arg0, %c0_i32 : i32, i32
  }
  func.func @transform_1(%arg0: i32) -> (i32, i32) {
    %c0_i32 = arith.constant 0 : i32
    %c0_i32_0 = arith.constant 0 : i32
    return %arg0, %c0_i32 : i32, i32
  }
  func.func @transform_2(%arg0: i32) -> (i32, i32) {
    %c0_i32 = arith.constant 0 : i32
    %c0_i32_0 = arith.constant 0 : i32
    %c0_i32_1 = arith.constant 0 : i32
    return %c0_i32, %c0_i32_0 : i32, i32
  }
  func.func @transform_3(%arg0: i32) -> (i32, i32) {
    %c0_i32 = arith.constant 0 : i32
    %c0_i32_0 = arith.constant 0 : i32
    %c0_i32_1 = arith.constant 0 : i32
    return %c0_i32, %c0_i32_0 : i32, i32
  }
  func.func @transform_4(%arg0: i32) -> (i32, i32) {
    %c0_i32 = arith.constant 0 : i32
    %c0_i32_0 = arith.constant 0 : i32
    %c0_i32_1 = arith.constant 0 : i32
    return %c0_i32, %c0_i32_0 : i32, i32
  }
  func.func @transform_5(%arg0: i32) -> (i32, i32) {
    %c0_i32 = arith.constant 0 : i32
    %c0_i32_0 = arith.constant 0 : i32
    return %arg0, %c0_i32 : i32, i32
  }
}

module attributes {stable_mosaic.version = 11 : i64} {
  func.func @_ft_kernel(%arg0: i32, %arg1: memref<16x12xf32, #tpu.memory_space<vmem>>, %arg2: memref<16x5xf32, #tpu.memory_space<vmem>>, %arg3: memref<12x144xf32, #tpu.memory_space<vmem>>, %arg4: memref<5x144xf32, #tpu.memory_space<vmem>>, %arg5: memref<1x144xf32, #tpu.memory_space<vmem>>, %arg6: memref<16x144xf32, #tpu.memory_space<vmem>>) attributes {dimension_semantics = [#tpu.dimension_semantics<parallel>], iteration_bounds = array<i64: 2>, scalar_prefetch = 0 : i64, scratch_operands = 0 : i64, tpu.core_type = #tpu.core_type<tc>, window_params = [{transform_indices = @transform_0, window_bounds = array<i64: 16, 12>}, {transform_indices = @transform_1, window_bounds = array<i64: 16, 5>}, {pipeline_mode = #tpu.pipeline_mode<synchronous>, transform_indices = @transform_2, window_bounds = array<i64: 12, 144>}, {pipeline_mode = #tpu.pipeline_mode<synchronous>, transform_indices = @transform_3, window_bounds = array<i64: 5, 144>}, {pipeline_mode = #tpu.pipeline_mode<synchronous>, transform_indices = @transform_4, window_bounds = array<i64: 1, 144>}, {transform_indices = @transform_5, window_bounds = array<i64: 16, 144>}]} {
    %c0 = arith.constant 0 : index
    %c0_0 = arith.constant 0 : index
    %0 = vector.load %arg1[%c0, %c0_0] : memref<16x12xf32, #tpu.memory_space<vmem>>, vector<16x12xf32>
    %c0_1 = arith.constant 0 : index
    %c0_2 = arith.constant 0 : index
    %1 = vector.load %arg2[%c0_1, %c0_2] : memref<16x5xf32, #tpu.memory_space<vmem>>, vector<16x5xf32>
    %c0_3 = arith.constant 0 : index
    %c0_4 = arith.constant 0 : index
    %2 = vector.load %arg3[%c0_3, %c0_4] : memref<12x144xf32, #tpu.memory_space<vmem>>, vector<12x144xf32>
    %cst = arith.constant dense<0.000000e+00> : vector<16x144xf32>
    %3 = tpu.matmul %0, %2, %cst {dimension_numbers = #tpu.dot_dimension_numbers<[1], [0], [0], [1], [0, 0, 1, 1], [], []>} : vector<16x12xf32>, vector<12x144xf32>, vector<16x144xf32> -> vector<16x144xf32>
    %c0_5 = arith.constant 0 : index
    %c0_6 = arith.constant 0 : index
    %4 = vector.load %arg4[%c0_5, %c0_6] : memref<5x144xf32, #tpu.memory_space<vmem>>, vector<5x144xf32>
    %cst_7 = arith.constant dense<0.000000e+00> : vector<16x144xf32>
    %5 = tpu.matmul %1, %4, %cst_7 {dimension_numbers = #tpu.dot_dimension_numbers<[1], [0], [0], [1], [0, 0, 1, 1], [], []>} : vector<16x5xf32>, vector<5x144xf32>, vector<16x144xf32> -> vector<16x144xf32>
    %6 = arith.addf %3, %5 : vector<16x144xf32>
    %c0_8 = arith.constant 0 : index
    %c0_9 = arith.constant 0 : index
    %7 = vector.load %arg5[%c0_8, %c0_9] : memref<1x144xf32, #tpu.memory_space<vmem>>, vector<1x144xf32>
    %8 = vector.broadcast %7 : vector<1x144xf32> to vector<16x144xf32>
    %9 = arith.addf %6, %8 : vector<16x144xf32>
    %c0_10 = arith.constant 0 : index
    %c0_11 = arith.constant 0 : index
    %10 = vector.load %arg6[%c0_10, %c0_11] : memref<16x144xf32, #tpu.memory_space<vmem>>, vector<16x144xf32>
    tpu.vector_store %arg6[%c0_10, %c0_11], %9 {strides = array<i32>} : memref<16x144xf32, #tpu.memory_space<vmem>>, vector<16x144xf32>,
    return
  }
  func.func @transform_0(%arg0: i32) -> (i32, i32) {
    %c0_i32 = arith.constant 0 : i32
    %c0_i32_0 = arith.constant 0 : i32
    return %arg0, %c0_i32 : i32, i32
  }
  func.func @transform_1(%arg0: i32) -> (i32, i32) {
    %c0_i32 = arith.constant 0 : i32
    %c0_i32_0 = arith.constant 0 : i32
    return %arg0, %c0_i32 : i32, i32
  }
  func.func @transform_2(%arg0: i32) -> (i32, i32) {
    %c0_i32 = arith.constant 0 : i32
    %c0_i32_0 = arith.constant 0 : i32
    %c0_i32_1 = arith.constant 0 : i32
    return %c0_i32, %c0_i32_0 : i32, i32
  }
  func.func @transform_3(%arg0: i32) -> (i32, i32) {
    %c0_i32 = arith.constant 0 : i32
    %c0_i32_0 = arith.constant 0 : i32
    %c0_i32_1 = arith.constant 0 : i32
    return %c0_i32, %c0_i32_0 : i32, i32
  }
  func.func @transform_4(%arg0: i32) -> (i32, i32) {
    %c0_i32 = arith.constant 0 : i32
    %c0_i32_0 = arith.constant 0 : i32
    %c0_i32_1 = arith.constant 0 : i32
    return %c0_i32, %c0_i32_0 : i32, i32
  }
  func.func @transform_5(%arg0: i32) -> (i32, i32) {
    %c0_i32 = arith.constant 0 : i32
    %c0_i32_0 = arith.constant 0 : i32
    return %arg0, %c0_i32 : i32, i32
  }
}

</mosaic_0001>

<llo_original>
// kernel: tpu_custom_call.1
$region0: #{tpu_custom_call.1}
  #allocation0 [shape = 'u32[]', space=smem, size = 0x4, offset = 0x4, fixed_abs, tag = 'smem constant byte address 0x4 - core index']
  #allocation1 [shape = 'u32[144,128]{1,0:T(1,128)}', space=vmem, size = 0x12000, scoped, tag = 'internal scratch']
  %s0 = inlined_call_operand.vmem [shape: f32[32,12], index: 0, kind: input, shape index: {}]
  %s1 = inlined_call_operand.vmem [shape: f32[32,5], index: 1, kind: input, shape index: {}]
  %s2 = inlined_call_operand.vmem [shape: f32[12,144], index: 2, kind: input, shape index: {}]
  %s3 = inlined_call_operand.vmem [shape: f32[5,144], index: 3, kind: input, shape index: {}]
  %s4 = inlined_call_operand.vmem [shape: f32[1,144], index: 4, kind: input, shape index: {}]
  %s5 = inlined_call_operand.hbm [shape: f32[32,144], index: 5, kind: output, shape index: {}]
  %s6 = sld [smem:[#allocation0]]
  $region53: #{tpu_custom_call.1} parent=0
    _
  %s8 = ssub.s32 1, %s6
  %s9 = scalar_select 0, %s8, %s6
  $region1: #{tpu_custom_call.1} parent=0
    #allocation2 [shape = 'u8[32768]{0}', space=vmem, size = 0x8000, scoped, tag = 'output window, operand 0']
    #allocation3 [shape = 's32[2]{0}', space=sflag, size = 0x8, scoped, tag = 'scoped memory for tpu_custom_call.1']
    %10 = vsyncpa [#allocation3], 0
    %s11 = scalar_lea.sflag [#allocation3], 1
    %12 = vsyncpa %s11, 0
    loop: start=0, step=1, limit=4
    $region2: #{tpu_custom_call.1} parent=1 // loop_pre_header
      _
    $region3: #{tpu_custom_call.1} parent=1 // loop_header
      %s14 = sphi 0, %s18
      %p15 = scmp.ge.s32.totalorder %s14, 4
      %s24 = sphi 0, %s26
      %s27 = sphi 0, %s24
      %s28 = sphi 0, %s27
      %s44 = sphi 0, %s28
      %s50 = sphi 0, %s52
      %s53 = sphi 0, %s50
      %s54 = sphi 0, %s53
      %s70 = sphi 0, %s54
      %s74 = sphi 0, %s74
      %s76 = sphi 0, %s74
      %s77 = sphi 0, %s76
      %s91 = sphi 0, %s77
      %s95 = sphi 0, %s95
      %s97 = sphi 0, %s95
      %s98 = sphi 0, %s97
      %s112 = sphi 0, %s98
      %s116 = sphi 0, %s116
      %s118 = sphi 0, %s116
      %s119 = sphi 0, %s118
      %s133 = sphi 0, %s119
      %s139 = sphi 0, %s141
      %s142 = sphi 0, %s139
      %s143 = sphi 0, %s142
      %s159 = sphi 0, %s143
    $region4: #{tpu_custom_call.1} parent=1 // loop_header_branch
      %17 = sbr.rel (%p15) target = $region8
    $region5: #{tpu_custom_call.1} parent=1 // loop_body
      %s19 = ssub.s32 %s14, 1
      %s20 = ssub.s32 %s14, 2
      %s21 = sadd.s32 %s14, 1
      %s22 = ssub.s32 %s14, %s21
      %p23 = scmp.eq.s32.totalorder %s22, 0
      %s25 = sadd.s32 %s24, 1
      %s26 = scalar_select %p23, %s24, %s25
      %p29 = pneg %p23
      %p30 = scmp.eq.s32.totalorder %s14, 1
      %p31 = por %p29, %p30
      %p32 = scmp.ne.s32.totalorder %s24, %s27
      %p33 = scmp.eq.s32.totalorder %s14, 0
      %p34 = por %p32, %p33
      %p35 = scmp.ne.s32.totalorder %s24, %s27
      %p36 = scmp.eq.s32.totalorder %s19, 1
      %p37 = por %p35, %p36
      %p38 = scmp.ne.s32.totalorder %s27, %s28
      %p39 = scmp.eq.s32.totalorder %s19, 0
      %p40 = por %p38, %p39
      %p41 = scmp.ne.s32.totalorder %s27, %s28
      %p42 = scmp.eq.s32.totalorder %s20, 1
      %p43 = por %p41, %p42
      %p45 = scmp.ne.s32.totalorder %s28, %s44
      %p46 = scmp.eq.s32.totalorder %s20, 0
      %p47 = por %p45, %p46
      %s48 = ssub.s32 %s14, %s21
      %p49 = scmp.eq.s32.totalorder %s48, 0
      %s51 = sadd.s32 %s50, 1
      %s52 = scalar_select %p49, %s50, %s51
      %p55 = pneg %p49
      %p56 = scmp.eq.s32.totalorder %s14, 1
      %p57 = por %p55, %p56
      %p58 = scmp.ne.s32.totalorder %s50, %s53
      %p59 = scmp.eq.s32.totalorder %s14, 0
      %p60 = por %p58, %p59
      %p61 = scmp.ne.s32.totalorder %s50, %s53
      %p62 = scmp.eq.s32.totalorder %s19, 1
      %p63 = por %p61, %p62
      %p64 = scmp.ne.s32.totalorder %s53, %s54
      %p65 = scmp.eq.s32.totalorder %s19, 0
      %p66 = por %p64, %p65
      %p67 = scmp.ne.s32.totalorder %s53, %s54
      %p68 = scmp.eq.s32.totalorder %s20, 1
      %p69 = por %p67, %p68
      %p71 = scmp.ne.s32.totalorder %s54, %s70
      %p72 = scmp.eq.s32.totalorder %s20, 0
      %p73 = por %p71, %p72
      %s75 = sadd.s32 %s74, 1
      %p78 = scmp.eq.s32.totalorder %s14, 1
      %p79 = scmp.ne.s32.totalorder %s74, %s76
      %p80 = scmp.eq.s32.totalorder %s14, 0
      %p81 = por %p79, %p80
      %p82 = scmp.ne.s32.totalorder %s74, %s76
      %p83 = scmp.eq.s32.totalorder %s19, 1
      %p84 = por %p82, %p83
      %p85 = scmp.ne.s32.totalorder %s76, %s77
      %p86 = scmp.eq.s32.totalorder %s19, 0
      %p87 = por %p85, %p86
      %p88 = scmp.ne.s32.totalorder %s76, %s77
      %p89 = scmp.eq.s32.totalorder %s20, 1
      %p90 = por %p88, %p89
      %p92 = scmp.ne.s32.totalorder %s77, %s91
      %p93 = scmp.eq.s32.totalorder %s20, 0
      %p94 = por %p92, %p93
      %s96 = sadd.s32 %s95, 1
      %p99 = scmp.eq.s32.totalorder %s14, 1
      %p100 = scmp.ne.s32.totalorder %s95, %s97
      %p101 = scmp.eq.s32.totalorder %s14, 0
      %p102 = por %p100, %p101
      %p103 = scmp.ne.s32.totalorder %s95, %s97
      %p104 = scmp.eq.s32.totalorder %s19, 1
      %p105 = por %p103, %p104
      %p106 = scmp.ne.s32.totalorder %s97, %s98
      %p107 = scmp.eq.s32.totalorder %s19, 0
      %p108 = por %p106, %p107
      %p109 = scmp.ne.s32.totalorder %s97, %s98
      %p110 = scmp.eq.s32.totalorder %s20, 1
      %p111 = por %p109, %p110
      %p113 = scmp.ne.s32.totalorder %s98, %s112
      %p114 = scmp.eq.s32.totalorder %s20, 0
      %p115 = por %p113, %p114
      %s117 = sadd.s32 %s116, 1
      %p120 = scmp.eq.s32.totalorder %s14, 1
      %p121 = scmp.ne.s32.totalorder %s116, %s118
      %p122 = scmp.eq.s32.totalorder %s14, 0
      %p123 = por %p121, %p122
      %p124 = scmp.ne.s32.totalorder %s116, %s118
      %p125 = scmp.eq.s32.totalorder %s19, 1
      %p126 = por %p124, %p125
      %p127 = scmp.ne.s32.totalorder %s118, %s119
      %p128 = scmp.eq.s32.totalorder %s19, 0
      %p129 = por %p127, %p128
      %p130 = scmp.ne.s32.totalorder %s118, %s119
      %p131 = scmp.eq.s32.totalorder %s20, 1
      %p132 = por %p130, %p131
      %p134 = scmp.ne.s32.totalorder %s119, %s133
      %p135 = scmp.eq.s32.totalorder %s20, 0
      %p136 = por %p134, %p135
      %s137 = ssub.s32 %s14, %s21
      %p138 = scmp.eq.s32.totalorder %s137, 0
      %s140 = sadd.s32 %s139, 1
      %s141 = scalar_select %p138, %s139, %s140
      %p144 = pneg %p138
      %p145 = scmp.eq.s32.totalorder %s14, 1
      %p146 = por %p144, %p145
      %p147 = scmp.ne.s32.totalorder %s139, %s142
      %p148 = scmp.eq.s32.totalorder %s14, 0
      %p149 = por %p147, %p148
      %p150 = scmp.ne.s32.totalorder %s139, %s142
      %p151 = scmp.eq.s32.totalorder %s19, 1
      %p152 = por %p150, %p151
      %p153 = scmp.ne.s32.totalorder %s142, %s143
      %p154 = scmp.eq.s32.totalorder %s19, 0
      %p155 = por %p153, %p154
      %p156 = scmp.ne.s32.totalorder %s142, %s143
      %p157 = scmp.eq.s32.totalorder %s20, 1
      %p158 = por %p156, %p157
      %p160 = scmp.ne.s32.totalorder %s143, %s159
      %p161 = scmp.eq.s32.totalorder %s20, 0
      %p162 = por %p160, %p161
      %p163 = scmp.le.s32.totalorder 1, %s14
      %p164 = scmp.lt.s32.totalorder %s14, 3
      %p165 = pnand %p163, %p164
      %p166 = pneg %p165
      // Predicated region
      $region9: #{tpu_custom_call.1} parent=5 // pred_check
        _
      $region10: #{tpu_custom_call.1} parent=5 // pred_check_branch
        %168 = sbr.rel (%p165) target = $region12
      $region11: #{tpu_custom_call.1} parent=5 // pred_region
        %s169 = ssub.s32 %s14, 1
        // Predicated region
        $region13: #{tpu_custom_call.1} parent=11 // pred_check
          %p170 = pneg %p87
        $region14: #{tpu_custom_call.1} parent=11 // pred_check_branch
          %172 = sbr.rel (%p170) target = $region16
        $region15: #{tpu_custom_call.1} parent=11 // pred_region
          _
        $region16: #{tpu_custom_call.1} parent=11 // pred_fallthru
          _
        // Predicated region
        $region17: #{tpu_custom_call.1} parent=11 // pred_check
          %p173 = pneg %p108
        $region18: #{tpu_custom_call.1} parent=11 // pred_check_branch
          %175 = sbr.rel (%p173) target = $region20
        $region19: #{tpu_custom_call.1} parent=11 // pred_region
          _
        $region20: #{tpu_custom_call.1} parent=11 // pred_fallthru
          _
        // Predicated region
        $region21: #{tpu_custom_call.1} parent=11 // pred_check
          %p176 = pneg %p129
        $region22: #{tpu_custom_call.1} parent=11 // pred_check_branch
          %178 = sbr.rel (%p176) target = $region24
        $region23: #{tpu_custom_call.1} parent=11 // pred_region
          _
        $region24: #{tpu_custom_call.1} parent=11 // pred_fallthru
          _
      $region12: #{tpu_custom_call.1} parent=5 // pred_fallthru
        _
      %p179 = scmp.lt.s32.totalorder %s14, 2
      // Predicated region
      $region25: #{tpu_custom_call.1} parent=5 // pred_check
        %p180 = pneg %p179
      $region26: #{tpu_custom_call.1} parent=5 // pred_check_branch
        %182 = sbr.rel (%p180) target = $region28
      $region27: #{tpu_custom_call.1} parent=5 // pred_region
        // Predicated region
        $region29: #{tpu_custom_call.1} parent=27 // pred_check
          %p183 = pneg %p34
        $region30: #{tpu_custom_call.1} parent=27 // pred_check_branch
          %185 = sbr.rel (%p183) target = $region32
        $region31: #{tpu_custom_call.1} parent=27 // pred_region
          %s186 = smul.u32 2, %s14
          %p187 = scmp.lt.s32.totalorder %s186, 3
          %s188 = scalar_select %p187, %s186, 3
          %s189 = smul.addr %s188, 8
          %s190 = scalar_lea.vmem %s0, %s189
          %s191 = smul.u32 2, %s14
        $region32: #{tpu_custom_call.1} parent=27 // pred_fallthru
          _
        // Predicated region
        $region33: #{tpu_custom_call.1} parent=27 // pred_check
          %p192 = pneg %p60
        $region34: #{tpu_custom_call.1} parent=27 // pred_check_branch
          %194 = sbr.rel (%p192) target = $region36
        $region35: #{tpu_custom_call.1} parent=27 // pred_region
          %s195 = smul.u32 2, %s14
          %p196 = scmp.lt.s32.totalorder %s195, 3
          %s197 = scalar_select %p196, %s195, 3
          %s198 = smul.addr %s197, 8
          %s199 = scalar_lea.vmem %s1, %s198
          %s200 = smul.u32 2, %s14
        $region36: #{tpu_custom_call.1} parent=27 // pred_fallthru
          _
      $region28: #{tpu_custom_call.1} parent=5 // pred_fallthru
        _
      %p201 = scmp.le.s32.totalorder 1, %s14
      %p202 = scmp.lt.s32.totalorder %s14, 3
      %p203 = pnand %p201, %p202
      %p204 = pneg %p203
      // Predicated region
      $region37: #{tpu_custom_call.1} parent=5 // pred_check
        _
      $region38: #{tpu_custom_call.1} parent=5 // pred_check_branch
        %206 = sbr.rel (%p203) target = $region40
      $region39: #{tpu_custom_call.1} parent=5 // pred_region
        %s207 = ssub.s32 %s14, 1
        %s208 = smul.u32 2, %s19
        %p209 = scmp.lt.s32.totalorder %s208, 3
        %s210 = scalar_select %p209, %s208, 3
        %s211 = smul.addr %s210, 8
        %s212 = scalar_lea.vmem %s0, %s211
        %p213 = pneg %p40
        %p214 = pneg %p37
        %s215 = smul.u32 2, %s19
        %p216 = scmp.lt.s32.totalorder %s215, 3
        %s217 = scalar_select %p216, %s215, 3
        %s218 = smul.addr %s217, 8
        %s219 = scalar_lea.vmem %s1, %s218
        %p220 = pneg %p66
        %p221 = pneg %p63
        %p222 = pneg %p87
        %p223 = pneg %p84
        %p224 = pneg %p108
        %p225 = pneg %p105
        %p226 = pneg %p129
        %p227 = pneg %p126
        %p228 = pneg %p155
        %p229 = pneg %p152
        %s230 = sand.u32 %s142, 1
        %s231 = scalar_lea.sflag [#allocation3], %s230
        %s232 = sand.u32 %s142, 1
        %s233 = smul.addr %s232, 32
        %s234 = scalar_lea.vmem [#allocation2], %s233
        %s235 = smul.u32 2, %s19
        %p236 = scmp.lt.s32.totalorder %s235, 3
        %s237 = scalar_select %p236, %s235, 3
        %s238 = smul.addr %s237, 8
        %s239 = scalar_lea.vmem %s0, %s238
        %s240 = smul.u32 2, %s19
        %s241 = smul.u32 2, %s19
        %p242 = scmp.lt.s32.totalorder %s241, 3
        %s243 = scalar_select %p242, %s241, 3
        %s244 = smul.addr %s243, 8
        %s245 = scalar_lea.vmem %s1, %s244
        %s246 = smul.u32 2, %s19
        %s247 = smul.u32 2, %s19
        %v248 = vld [vmem:[%s239] sm:$0xff]
        %v249 = vld [vmem:[%s239 + $0x8] sm:$0xff]
        %v250 = vld [vmem:[%s245] sm:$0xff]
        %v251 = vld [vmem:[%s245 + $0x8] sm:$0xff]
        %v252 = vld [vmem:[%s2] sm:$0xff]
        %v253 = vld [vmem:[%s2 + $0x8] sm:$0xff]
        %v254 = vld [vmem:[%s2 + $0x10] sm:$0xf]
        %v255 = vld [vmem:[%s2 + $0x18] sm:$0xf]
        %v256 = vld [vmem:[%s3] sm:$0x1f]
        %v257 = vld [vmem:[%s3 + $0x8] sm:$0x1f]
        %vm258 = vcmask 39936
        %v260 = vsel %vm258, %v250, 0
        %v263 = vsel %vm258, %v251, 0
        %vm265 = vcmask 1044480
        %v267 = vsel %vm265, %v256, 0
        %v270 = vsel %vm265, %v257, 0
        %272 = vmatprep.subr.mxu0 %v270
        %273 = vmatpush1.msra.mxu0 %v267
        %274 = vmatprep.subr.mxu0 0.0
        %275 = vmatpush1.msra.mxu0 0.0
        %276 = vmatprep.subr.mxu0 0.0
        %277 = vmatpush1.msra.mxu0 0.0
        %278 = vmatprep.subr.mxu0 0.0
        %279 = vmatpush1.msra.mxu0 0.0
        %280 = vmatprep.subr.mxu0 0.0
        %281 = vmatpush1.msra.mxu0 0.0
        %282 = vmatprep.subr.mxu0 0.0
        %283 = vmatpush1.msra.mxu0 0.0
        %284 = vmatprep.subr.mxu0 0.0
        %285 = vmatpush1.msra.mxu0 0.0
        %286 = vmatprep.subr.mxu0 0.0
        %287 = vmatpush1.msra.mxu0 0.0
        %288 = vmatprep.subr.mxu0 0.0
        %289 = vmatpush1.msra.mxu0 0.0
        %290 = vmatprep.subr.mxu0 0.0
        %291 = vmatpush1.msra.mxu0 0.0
        %292 = vmatprep.subr.mxu0 0.0
        %293 = vmatpush1.msra.mxu0 0.0
        %294 = vmatprep.subr.mxu0 0.0
        %295 = vmatpush1.msra.mxu0 0.0
        %296 = vmatprep.subr.mxu0 0.0
        %297 = vmatpush1.msra.mxu0 0.0
        %298 = vmatprep.subr.mxu0 0.0
        %299 = vmatpush1.msra.mxu0 0.0
        %300 = vmatprep.subr.mxu0 0.0
        %301 = vmatpush1.msra.mxu0 0.0
        %302 = vmatprep.subr.mxu0 0.0
        %303 = vmatpush1.msra.mxu0 0.0
        %304 = vmatprep.subr.mxu0 0.0
        %305 = vmatpush1.msra.mxu0 0.0
        %306 = vmatprep.subr.mxu0 0.0
        %307 = vmatpush1.msra.mxu0 0.0
        %308 = vmatprep.subr.mxu0 0.0
        %309 = vmatpush1.msra.mxu0 0.0
        %310 = vmatprep.subr.mxu0 0.0
        %311 = vmatpush1.msra.mxu0 0.0
        %312 = vmatprep.subr.mxu0 0.0
        %313 = vmatpush1.msra.mxu0 0.0
        %314 = vmatprep.subr.mxu0 0.0
        %315 = vmatpush1.msra.mxu0 0.0
        %316 = vmatprep.subr.mxu0 0.0
        %317 = vmatpush1.msra.mxu0 0.0
        %318 = vmatprep.subr.mxu0 0.0
        %319 = vmatpush1.msra.mxu0 0.0
        %320 = vmatprep.subr.mxu0 0.0
        %321 = vmatpush1.msra.mxu0 0.0
        %322 = vmatprep.subr.mxu0 0.0
        %323 = vmatpush1.msra.mxu0 0.0
        %324 = vmatprep.subr.mxu0 0.0
        %325 = vmatpush1.msra.mxu0 0.0
        %326 = vmatprep.subr.mxu0 0.0
        %327 = vmatpush1.msra.mxu0 0.0
        %328 = vmatprep.subr.mxu0 0.0
        %329 = vmatpush1.msra.mxu0 0.0
        %330 = vmatprep.subr.mxu0 0.0
        %331 = vmatpush1.msra.mxu0 0.0
        %332 = vmatprep.subr.mxu0 0.0
        %333 = vmatpush1.msra.mxu0 0.0
        %334 = vmatprep.subr.mxu0 0.0
        %335 = vmatpush1.msra.mxu0 0.0
        %336 = vmatprep.mubr.f32.mxu0 0.0
        %337 = vmatmul.mubr.f32.gmra.mrb[0].mxu0 %v260
        %v338 = vpop.f32.mrb[0].mxu0
        %v339 = vadd.f32 0.0, %v338
        %v340 = vpop.f32.mrb[0].mxu0
        %v341 = vadd.f32 0.0, %v340
        %342 = vmatprep.mubr.f32.mxu0 0.0
        %343 = vmatmul.mubr.f32.gmra.mrb[0].mxu0 %v263
        %v344 = vpop.f32.mrb[0].mxu0
        %v345 = vadd.f32 0.0, %v344
        %v346 = vpop.f32.mrb[0].mxu0
        %v347 = vadd.f32 0.0, %v346
        %348 = vdwg.mxu0
        %vm349 = vcmask 97280
        %v351 = vsel %vm349, %v248, 0
        %v354 = vsel %vm349, %v249, 0
        %vm356 = vcmask 1043456
        %v358 = vsel %vm356, %v254, 0
        %v361 = vsel %vm356, %v255, 0
        %363 = vmatprep.subr.mxu0 %v253
        %364 = vmatpush1.msra.mxu0 %v252
        %365 = vmatprep.subr.mxu0 %v361
        %366 = vmatpush1.msra.mxu0 %v358
        %367 = vmatprep.subr.mxu0 0.0
        %368 = vmatpush1.msra.mxu0 0.0
        %369 = vmatprep.subr.mxu0 0.0
        %370 = vmatpush1.msra.mxu0 0.0
        %371 = vmatprep.subr.mxu0 0.0
        %372 = vmatpush1.msra.mxu0 0.0
        %373 = vmatprep.subr.mxu0 0.0
        %374 = vmatpush1.msra.mxu0 0.0
        %375 = vmatprep.subr.mxu0 0.0
        %376 = vmatpush1.msra.mxu0 0.0
        %377 = vmatprep.subr.mxu0 0.0
        %378 = vmatpush1.msra.mxu0 0.0
        %379 = vmatprep.subr.mxu0 0.0
        %380 = vmatpush1.msra.mxu0 0.0
        %381 = vmatprep.subr.mxu0 0.0
        %382 = vmatpush1.msra.mxu0 0.0
        %383 = vmatprep.subr.mxu0 0.0
        %384 = vmatpush1.msra.mxu0 0.0
        %385 = vmatprep.subr.mxu0 0.0
        %386 = vmatpush1.msra.mxu0 0.0
        %387 = vmatprep.subr.mxu0 0.0
        %388 = vmatpush1.msra.mxu0 0.0
        %389 = vmatprep.subr.mxu0 0.0
        %390 = vmatpush1.msra.mxu0 0.0
        %391 = vmatprep.subr.mxu0 0.0
        %392 = vmatpush1.msra.mxu0 0.0
        %393 = vmatprep.subr.mxu0 0.0
        %394 = vmatpush1.msra.mxu0 0.0
        %395 = vmatprep.subr.mxu0 0.0
        %396 = vmatpush1.msra.mxu0 0.0
        %397 = vmatprep.subr.mxu0 0.0
        %398 = vmatpush1.msra.mxu0 0.0
        %399 = vmatprep.subr.mxu0 0.0
        %400 = vmatpush1.msra.mxu0 0.0
        %401 = vmatprep.subr.mxu0 0.0
        %402 = vmatpush1.msra.mxu0 0.0
        %403 = vmatprep.subr.mxu0 0.0
        %404 = vmatpush1.msra.mxu0 0.0
        %405 = vmatprep.subr.mxu0 0.0
        %406 = vmatpush1.msra.mxu0 0.0
        %407 = vmatprep.subr.mxu0 0.0
        %408 = vmatpush1.msra.mxu0 0.0
        %409 = vmatprep.subr.mxu0 0.0
        %410 = vmatpush1.msra.mxu0 0.0
        %411 = vmatprep.subr.mxu0 0.0
        %412 = vmatpush1.msra.mxu0 0.0
        %413 = vmatprep.subr.mxu0 0.0
        %414 = vmatpush1.msra.mxu0 0.0
        %415 = vmatprep.subr.mxu0 0.0
        %416 = vmatpush1.msra.mxu0 0.0
        %417 = vmatprep.subr.mxu0 0.0
        %418 = vmatpush1.msra.mxu0 0.0
        %419 = vmatprep.subr.mxu0 0.0
        %420 = vmatpush1.msra.mxu0 0.0
        %421 = vmatprep.subr.mxu0 0.0
        %422 = vmatpush1.msra.mxu0 0.0
        %423 = vmatprep.subr.mxu0 0.0
        %424 = vmatpush1.msra.mxu0 0.0
        %425 = vmatprep.subr.mxu0 0.0
        %426 = vmatpush1.msra.mxu0 0.0
        %427 = vmatprep.mubr.f32.mxu0 0.0
        %428 = vmatmul.mubr.f32.gmra.mrb[0].mxu0 %v351
        %v429 = vpop.f32.mrb[0].mxu0
        %v430 = vadd.f32 %v339, %v429
        %v431 = vpop.f32.mrb[0].mxu0
        %v432 = vadd.f32 %v341, %v431
        %433 = vmatprep.mubr.f32.mxu0 0.0
        %434 = vmatmul.mubr.f32.gmra.mrb[0].mxu0 %v354
        %v435 = vpop.f32.mrb[0].mxu0
        %v436 = vadd.f32 %v345, %v435
        %v437 = vpop.f32.mrb[0].mxu0
        %v438 = vadd.f32 %v347, %v437
        %439 = vdwg.mxu0
        %v440 = vld [vmem:[%s4] sm:$0x3]
        %v442 = vlaneseq
        %v443 = vshrl.u32 %v442, 7
        %v444 = vsub.s32 0, %v443
        %v445 = vrot.slane %v440, %v444
        %v446 = vlaneseq
        %v447 = vshrl.u32 %v446, 7
        %v448 = vsub.s32 1, %v447
        %v449 = vrot.slane %v440, %v448
        %v452 = vadd.f32 %v430, %v445
        %v453 = vadd.f32 %v432, %v449
        %v454 = vadd.f32 %v436, %v445
        %v455 = vadd.f32 %v438, %v449
        %456 = vst [vmem:[%s234] sm:$0xff] %v452
        %vm457 = vcmask 130048
        %458 = vst.msk [vmem:[%s234 + $0x8] sm:$0xff] %vm457, %v453
        %459 = vst [vmem:[%s234 + $0x10] sm:$0xff] %v454
        %460 = vst.msk [vmem:[%s234 + $0x18] sm:$0xff] %vm457, %v455
        %s461 = sand.u32 %s142, 1
        %s462 = scalar_lea.sflag [#allocation3], %s461
        %s463 = sand.u32 %s142, 1
        %s464 = smul.addr %s463, 32
        %s465 = scalar_lea.vmem [#allocation2], %s464
        // Predicated region
        $region41: #{tpu_custom_call.1} parent=39 // pred_check
          %p466 = pneg %p152
        $region42: #{tpu_custom_call.1} parent=39 // pred_check_branch
          %468 = sbr.rel (%p466) target = $region44
        $region43: #{tpu_custom_call.1} parent=39 // pred_region
          %s469 = smul.u32 2, %s19
          %s471 = ssub.s32 512, 512
          %472 = vsyncadd %s462, %s471
          %s473 = smul.addr %s469, 2
          %s474 = smul.addr %s473, 128
          %s475 = scalar_lea.hbm %s5, %s474
          %s476 = sshll.u32 %s465, 4
          %s477 = int_to_ptr.vmem [resolvable:$true] %s476
          %482 = dma.vmem_to_hbm [thread:$0]  %s477, 512, %s475, %s462, 256, 256, 16
        $region44: #{tpu_custom_call.1} parent=39 // pred_fallthru
          _
      $region40: #{tpu_custom_call.1} parent=5 // pred_fallthru
        _
      %p483 = scmp.le.s32.totalorder 2, %s14
      // Predicated region
      $region45: #{tpu_custom_call.1} parent=5 // pred_check
        %p484 = pneg %p483
      $region46: #{tpu_custom_call.1} parent=5 // pred_check_branch
        %486 = sbr.rel (%p484) target = $region48
      $region47: #{tpu_custom_call.1} parent=5 // pred_region
        %s487 = ssub.s32 %s14, 2
        // Predicated region
        $region49: #{tpu_custom_call.1} parent=47 // pred_check
          %p488 = pneg %p158
        $region50: #{tpu_custom_call.1} parent=47 // pred_check_branch
          %490 = sbr.rel (%p488) target = $region52
        $region51: #{tpu_custom_call.1} parent=47 // pred_region
          %s491 = sand.u32 %s143, 1
          %s492 = scalar_lea.sflag [#allocation3], %s491
          %s493 = sand.u32 %s143, 1
          %s494 = smul.addr %s493, 32
          %s495 = scalar_lea.vmem [#allocation2], %s494
          %496 = dma.done %s492, 512
        $region52: #{tpu_custom_call.1} parent=47 // pred_fallthru
          _
      $region48: #{tpu_custom_call.1} parent=5 // pred_fallthru
        _
    $region6: #{tpu_custom_call.1} parent=1 // loop_footer
      %s18 = sadd.s32 1, %s14
    $region7: #{tpu_custom_call.1} parent=1 // loop_footer_branch
      %13 = sbr.rel target = $region3
    $region8: #{tpu_custom_call.1} parent=1 // loop_exit
      _
    %497 = vsyncpa [#allocation3], 1
    %s498 = scalar_lea.sflag [#allocation3], 1
    %499 = vsyncpa %s498, 1

// kernel: tpu_custom_call.1
$region0: #{tpu_custom_call.1}
  #allocation0 [shape = 'u32[]', space=smem, size = 0x4, offset = 0x4, fixed_abs, tag = 'smem constant byte address 0x4 - core index']
  #allocation1 [shape = 'u32[144,128]{1,0:T(1,128)}', space=vmem, size = 0x12000, scoped, tag = 'internal scratch']
  %s0 = inlined_call_operand.vmem [shape: f32[32,12], index: 0, kind: input, shape index: {}]
  %s1 = inlined_call_operand.vmem [shape: f32[32,5], index: 1, kind: input, shape index: {}]
  %s2 = inlined_call_operand.vmem [shape: f32[12,144], index: 2, kind: input, shape index: {}]
  %s3 = inlined_call_operand.vmem [shape: f32[5,144], index: 3, kind: input, shape index: {}]
  %s4 = inlined_call_operand.vmem [shape: f32[1,144], index: 4, kind: input, shape index: {}]
  %s5 = inlined_call_operand.hbm [shape: f32[32,144], index: 5, kind: output, shape index: {}]
  %s6 = sld [smem:[#allocation0]]
  $region53: #{tpu_custom_call.1} parent=0
    _
  %s8 = ssub.s32 1, %s6
  %s9 = scalar_select 0, %s8, %s6
  $region1: #{tpu_custom_call.1} parent=0
    #allocation2 [shape = 'u8[32768]{0}', space=vmem, size = 0x8000, scoped, tag = 'output window, operand 0']
    #allocation3 [shape = 's32[2]{0}', space=sflag, size = 0x8, scoped, tag = 'scoped memory for tpu_custom_call.1']
    %10 = vsyncpa [#allocation3], 0
    %s11 = scalar_lea.sflag [#allocation3], 1
    %12 = vsyncpa %s11, 0
    loop: start=0, step=1, limit=4
    $region2: #{tpu_custom_call.1} parent=1 // loop_pre_header
      _
    $region3: #{tpu_custom_call.1} parent=1 // loop_header
      %s14 = sphi 0, %s18
      %p15 = scmp.ge.s32.totalorder %s14, 4
      %s24 = sphi 0, %s26
      %s27 = sphi 0, %s24
      %s28 = sphi 0, %s27
      %s44 = sphi 0, %s28
      %s50 = sphi 0, %s52
      %s53 = sphi 0, %s50
      %s54 = sphi 0, %s53
      %s70 = sphi 0, %s54
      %s74 = sphi 0, %s74
      %s76 = sphi 0, %s74
      %s77 = sphi 0, %s76
      %s91 = sphi 0, %s77
      %s95 = sphi 0, %s95
      %s97 = sphi 0, %s95
      %s98 = sphi 0, %s97
      %s112 = sphi 0, %s98
      %s116 = sphi 0, %s116
      %s118 = sphi 0, %s116
      %s119 = sphi 0, %s118
      %s133 = sphi 0, %s119
      %s139 = sphi 0, %s141
      %s142 = sphi 0, %s139
      %s143 = sphi 0, %s142
      %s159 = sphi 0, %s143
    $region4: #{tpu_custom_call.1} parent=1 // loop_header_branch
      %17 = sbr.rel (%p15) target = $region8
    $region5: #{tpu_custom_call.1} parent=1 // loop_body
      %s19 = ssub.s32 %s14, 1
      %s20 = ssub.s32 %s14, 2
      %s21 = sadd.s32 %s14, 1
      %s22 = ssub.s32 %s14, %s21
      %p23 = scmp.eq.s32.totalorder %s22, 0
      %s25 = sadd.s32 %s24, 1
      %s26 = scalar_select %p23, %s24, %s25
      %p29 = pneg %p23
      %p30 = scmp.eq.s32.totalorder %s14, 1
      %p31 = por %p29, %p30
      %p32 = scmp.ne.s32.totalorder %s24, %s27
      %p33 = scmp.eq.s32.totalorder %s14, 0
      %p34 = por %p32, %p33
      %p35 = scmp.ne.s32.totalorder %s24, %s27
      %p36 = scmp.eq.s32.totalorder %s19, 1
      %p37 = por %p35, %p36
      %p38 = scmp.ne.s32.totalorder %s27, %s28
      %p39 = scmp.eq.s32.totalorder %s19, 0
      %p40 = por %p38, %p39
      %p41 = scmp.ne.s32.totalorder %s27, %s28
      %p42 = scmp.eq.s32.totalorder %s20, 1
      %p43 = por %p41, %p42
      %p45 = scmp.ne.s32.totalorder %s28, %s44
      %p46 = scmp.eq.s32.totalorder %s20, 0
      %p47 = por %p45, %p46
      %s48 = ssub.s32 %s14, %s21
      %p49 = scmp.eq.s32.totalorder %s48, 0
      %s51 = sadd.s32 %s50, 1
      %s52 = scalar_select %p49, %s50, %s51
      %p55 = pneg %p49
      %p56 = scmp.eq.s32.totalorder %s14, 1
      %p57 = por %p55, %p56
      %p58 = scmp.ne.s32.totalorder %s50, %s53
      %p59 = scmp.eq.s32.totalorder %s14, 0
      %p60 = por %p58, %p59
      %p61 = scmp.ne.s32.totalorder %s50, %s53
      %p62 = scmp.eq.s32.totalorder %s19, 1
      %p63 = por %p61, %p62
      %p64 = scmp.ne.s32.totalorder %s53, %s54
      %p65 = scmp.eq.s32.totalorder %s19, 0
      %p66 = por %p64, %p65
      %p67 = scmp.ne.s32.totalorder %s53, %s54
      %p68 = scmp.eq.s32.totalorder %s20, 1
      %p69 = por %p67, %p68
      %p71 = scmp.ne.s32.totalorder %s54, %s70
      %p72 = scmp.eq.s32.totalorder %s20, 0
      %p73 = por %p71, %p72
      %s75 = sadd.s32 %s74, 1
      %p78 = scmp.eq.s32.totalorder %s14, 1
      %p79 = scmp.ne.s32.totalorder %s74, %s76
      %p80 = scmp.eq.s32.totalorder %s14, 0
      %p81 = por %p79, %p80
      %p82 = scmp.ne.s32.totalorder %s74, %s76
      %p83 = scmp.eq.s32.totalorder %s19, 1
      %p84 = por %p82, %p83
      %p85 = scmp.ne.s32.totalorder %s76, %s77
      %p86 = scmp.eq.s32.totalorder %s19, 0
      %p87 = por %p85, %p86
      %p88 = scmp.ne.s32.totalorder %s76, %s77
      %p89 = scmp.eq.s32.totalorder %s20, 1
      %p90 = por %p88, %p89
      %p92 = scmp.ne.s32.totalorder %s77, %s91
      %p93 = scmp.eq.s32.totalorder %s20, 0
      %p94 = por %p92, %p93
      %s96 = sadd.s32 %s95, 1
      %p99 = scmp.eq.s32.totalorder %s14, 1
      %p100 = scmp.ne.s32.totalorder %s95, %s97
      %p101 = scmp.eq.s32.totalorder %s14, 0
      %p102 = por %p100, %p101
      %p103 = scmp.ne.s32.totalorder %s95, %s97
      %p104 = scmp.eq.s32.totalorder %s19, 1
      %p105 = por %p103, %p104
      %p106 = scmp.ne.s32.totalorder %s97, %s98
      %p107 = scmp.eq.s32.totalorder %s19, 0
      %p108 = por %p106, %p107
      %p109 = scmp.ne.s32.totalorder %s97, %s98
      %p110 = scmp.eq.s32.totalorder %s20, 1
      %p111 = por %p109, %p110
      %p113 = scmp.ne.s32.totalorder %s98, %s112
      %p114 = scmp.eq.s32.totalorder %s20, 0
      %p115 = por %p113, %p114
      %s117 = sadd.s32 %s116, 1
      %p120 = scmp.eq.s32.totalorder %s14, 1
      %p121 = scmp.ne.s32.totalorder %s116, %s118
      %p122 = scmp.eq.s32.totalorder %s14, 0
      %p123 = por %p121, %p122
      %p124 = scmp.ne.s32.totalorder %s116, %s118
      %p125 = scmp.eq.s32.totalorder %s19, 1
      %p126 = por %p124, %p125
      %p127 = scmp.ne.s32.totalorder %s118, %s119
      %p128 = scmp.eq.s32.totalorder %s19, 0
      %p129 = por %p127, %p128
      %p130 = scmp.ne.s32.totalorder %s118, %s119
      %p131 = scmp.eq.s32.totalorder %s20, 1
      %p132 = por %p130, %p131
      %p134 = scmp.ne.s32.totalorder %s119, %s133
      %p135 = scmp.eq.s32.totalorder %s20, 0
      %p136 = por %p134, %p135
      %s137 = ssub.s32 %s14, %s21
      %p138 = scmp.eq.s32.totalorder %s137, 0
      %s140 = sadd.s32 %s139, 1
      %s141 = scalar_select %p138, %s139, %s140
      %p144 = pneg %p138
      %p145 = scmp.eq.s32.totalorder %s14, 1
      %p146 = por %p144, %p145
      %p147 = scmp.ne.s32.totalorder %s139, %s142
      %p148 = scmp.eq.s32.totalorder %s14, 0
      %p149 = por %p147, %p148
      %p150 = scmp.ne.s32.totalorder %s139, %s142
      %p151 = scmp.eq.s32.totalorder %s19, 1
      %p152 = por %p150, %p151
      %p153 = scmp.ne.s32.totalorder %s142, %s143
      %p154 = scmp.eq.s32.totalorder %s19, 0
      %p155 = por %p153, %p154
      %p156 = scmp.ne.s32.totalorder %s142, %s143
      %p157 = scmp.eq.s32.totalorder %s20, 1
      %p158 = por %p156, %p157
      %p160 = scmp.ne.s32.totalorder %s143, %s159
      %p161 = scmp.eq.s32.totalorder %s20, 0
      %p162 = por %p160, %p161
      %p163 = scmp.le.s32.totalorder 1, %s14
      %p164 = scmp.lt.s32.totalorder %s14, 3
      %p165 = pnand %p163, %p164
      %p166 = pneg %p165
      // Predicated region
      $region9: #{tpu_custom_call.1} parent=5 // pred_check
        _
      $region10: #{tpu_custom_call.1} parent=5 // pred_check_branch
        %168 = sbr.rel (%p165) target = $region12
      $region11: #{tpu_custom_call.1} parent=5 // pred_region
        %s169 = ssub.s32 %s14, 1
        // Predicated region
        $region13: #{tpu_custom_call.1} parent=11 // pred_check
          %p170 = pneg %p87
        $region14: #{tpu_custom_call.1} parent=11 // pred_check_branch
          %172 = sbr.rel (%p170) target = $region16
        $region15: #{tpu_custom_call.1} parent=11 // pred_region
          _
        $region16: #{tpu_custom_call.1} parent=11 // pred_fallthru
          _
        // Predicated region
        $region17: #{tpu_custom_call.1} parent=11 // pred_check
          %p173 = pneg %p108
        $region18: #{tpu_custom_call.1} parent=11 // pred_check_branch
          %175 = sbr.rel (%p173) target = $region20
        $region19: #{tpu_custom_call.1} parent=11 // pred_region
          _
        $region20: #{tpu_custom_call.1} parent=11 // pred_fallthru
          _
        // Predicated region
        $region21: #{tpu_custom_call.1} parent=11 // pred_check
          %p176 = pneg %p129
        $region22: #{tpu_custom_call.1} parent=11 // pred_check_branch
          %178 = sbr.rel (%p176) target = $region24
        $region23: #{tpu_custom_call.1} parent=11 // pred_region
          _
        $region24: #{tpu_custom_call.1} parent=11 // pred_fallthru
          _
      $region12: #{tpu_custom_call.1} parent=5 // pred_fallthru
        _
      %p179 = scmp.lt.s32.totalorder %s14, 2
      // Predicated region
      $region25: #{tpu_custom_call.1} parent=5 // pred_check
        %p180 = pneg %p179
      $region26: #{tpu_custom_call.1} parent=5 // pred_check_branch
        %182 = sbr.rel (%p180) target = $region28
      $region27: #{tpu_custom_call.1} parent=5 // pred_region
        // Predicated region
        $region29: #{tpu_custom_call.1} parent=27 // pred_check
          %p183 = pneg %p34
        $region30: #{tpu_custom_call.1} parent=27 // pred_check_branch
          %185 = sbr.rel (%p183) target = $region32
        $region31: #{tpu_custom_call.1} parent=27 // pred_region
          %s186 = smul.u32 2, %s14
          %p187 = scmp.lt.s32.totalorder %s186, 3
          %s188 = scalar_select %p187, %s186, 3
          %s189 = smul.addr %s188, 8
          %s190 = scalar_lea.vmem %s0, %s189
          %s191 = smul.u32 2, %s14
        $region32: #{tpu_custom_call.1} parent=27 // pred_fallthru
          _
        // Predicated region
        $region33: #{tpu_custom_call.1} parent=27 // pred_check
          %p192 = pneg %p60
        $region34: #{tpu_custom_call.1} parent=27 // pred_check_branch
          %194 = sbr.rel (%p192) target = $region36
        $region35: #{tpu_custom_call.1} parent=27 // pred_region
          %s195 = smul.u32 2, %s14
          %p196 = scmp.lt.s32.totalorder %s195, 3
          %s197 = scalar_select %p196, %s195, 3
          %s198 = smul.addr %s197, 8
          %s199 = scalar_lea.vmem %s1, %s198
          %s200 = smul.u32 2, %s14
        $region36: #{tpu_custom_call.1} parent=27 // pred_fallthru
          _
      $region28: #{tpu_custom_call.1} parent=5 // pred_fallthru
        _
      %p201 = scmp.le.s32.totalorder 1, %s14
      %p202 = scmp.lt.s32.totalorder %s14, 3
      %p203 = pnand %p201, %p202
      %p204 = pneg %p203
      // Predicated region
      $region37: #{tpu_custom_call.1} parent=5 // pred_check
        _
      $region38: #{tpu_custom_call.1} parent=5 // pred_check_branch
        %206 = sbr.rel (%p203) target = $region40
      $region39: #{tpu_custom_call.1} parent=5 // pred_region
        %s207 = ssub.s32 %s14, 1
        %s208 = smul.u32 2, %s19
        %p209 = scmp.lt.s32.totalorder %s208, 3
        %s210 = scalar_select %p209, %s208, 3
        %s211 = smul.addr %s210, 8
        %s212 = scalar_lea.vmem %s0, %s211
        %p213 = pneg %p40
        %p214 = pneg %p37
        %s215 = smul.u32 2, %s19
        %p216 = scmp.lt.s32.totalorder %s215, 3
        %s217 = scalar_select %p216, %s215, 3
        %s218 = smul.addr %s217, 8
        %s219 = scalar_lea.vmem %s1, %s218
        %p220 = pneg %p66
        %p221 = pneg %p63
        %p222 = pneg %p87
        %p223 = pneg %p84
        %p224 = pneg %p108
        %p225 = pneg %p105
        %p226 = pneg %p129
        %p227 = pneg %p126
        %p228 = pneg %p155
        %p229 = pneg %p152
        %s230 = sand.u32 %s142, 1
        %s231 = scalar_lea.sflag [#allocation3], %s230
        %s232 = sand.u32 %s142, 1
        %s233 = smul.addr %s232, 32
        %s234 = scalar_lea.vmem [#allocation2], %s233
        %s235 = smul.u32 2, %s19
        %p236 = scmp.lt.s32.totalorder %s235, 3
        %s237 = scalar_select %p236, %s235, 3
        %s238 = smul.addr %s237, 8
        %s239 = scalar_lea.vmem %s0, %s238
        %s240 = smul.u32 2, %s19
        %s241 = smul.u32 2, %s19
        %p242 = scmp.lt.s32.totalorder %s241, 3
        %s243 = scalar_select %p242, %s241, 3
        %s244 = smul.addr %s243, 8
        %s245 = scalar_lea.vmem %s1, %s244
        %s246 = smul.u32 2, %s19
        %s247 = smul.u32 2, %s19
        %v248 = vld [vmem:[%s239] sm:$0xff]
        %v249 = vld [vmem:[%s239 + $0x8] sm:$0xff]
        %v250 = vld [vmem:[%s245] sm:$0xff]
        %v251 = vld [vmem:[%s245 + $0x8] sm:$0xff]
        %v252 = vld [vmem:[%s2] sm:$0xff]
        %v253 = vld [vmem:[%s2 + $0x8] sm:$0xff]
        %v254 = vld [vmem:[%s2 + $0x10] sm:$0xf]
        %v255 = vld [vmem:[%s2 + $0x18] sm:$0xf]
        %v256 = vld [vmem:[%s3] sm:$0x1f]
        %v257 = vld [vmem:[%s3 + $0x8] sm:$0x1f]
        %vm258 = vcmask 39936
        %v260 = vsel %vm258, %v250, 0
        %v263 = vsel %vm258, %v251, 0
        %vm265 = vcmask 1044480
        %v267 = vsel %vm265, %v256, 0
        %v270 = vsel %vm265, %v257, 0
        %272 = vmatprep.subr.mxu0 %v270
        %273 = vmatpush1.msra.mxu0 %v267
        %274 = vmatprep.subr.mxu0 0.0
        %275 = vmatpush1.msra.mxu0 0.0
        %276 = vmatprep.subr.mxu0 0.0
        %277 = vmatpush1.msra.mxu0 0.0
        %278 = vmatprep.subr.mxu0 0.0
        %279 = vmatpush1.msra.mxu0 0.0
        %280 = vmatprep.subr.mxu0 0.0
        %281 = vmatpush1.msra.mxu0 0.0
        %282 = vmatprep.subr.mxu0 0.0
        %283 = vmatpush1.msra.mxu0 0.0
        %284 = vmatprep.subr.mxu0 0.0
        %285 = vmatpush1.msra.mxu0 0.0
        %286 = vmatprep.subr.mxu0 0.0
        %287 = vmatpush1.msra.mxu0 0.0
        %288 = vmatprep.subr.mxu0 0.0
        %289 = vmatpush1.msra.mxu0 0.0
        %290 = vmatprep.subr.mxu0 0.0
        %291 = vmatpush1.msra.mxu0 0.0
        %292 = vmatprep.subr.mxu0 0.0
        %293 = vmatpush1.msra.mxu0 0.0
        %294 = vmatprep.subr.mxu0 0.0
        %295 = vmatpush1.msra.mxu0 0.0
        %296 = vmatprep.subr.mxu0 0.0
        %297 = vmatpush1.msra.mxu0 0.0
        %298 = vmatprep.subr.mxu0 0.0
        %299 = vmatpush1.msra.mxu0 0.0
        %300 = vmatprep.subr.mxu0 0.0
        %301 = vmatpush1.msra.mxu0 0.0
        %302 = vmatprep.subr.mxu0 0.0
        %303 = vmatpush1.msra.mxu0 0.0
        %304 = vmatprep.subr.mxu0 0.0
        %305 = vmatpush1.msra.mxu0 0.0
        %306 = vmatprep.subr.mxu0 0.0
        %307 = vmatpush1.msra.mxu0 0.0
        %308 = vmatprep.subr.mxu0 0.0
        %309 = vmatpush1.msra.mxu0 0.0
        %310 = vmatprep.subr.mxu0 0.0
        %311 = vmatpush1.msra.mxu0 0.0
        %312 = vmatprep.subr.mxu0 0.0
        %313 = vmatpush1.msra.mxu0 0.0
        %314 = vmatprep.subr.mxu0 0.0
        %315 = vmatpush1.msra.mxu0 0.0
        %316 = vmatprep.subr.mxu0 0.0
        %317 = vmatpush1.msra.mxu0 0.0
        %318 = vmatprep.subr.mxu0 0.0
        %319 = vmatpush1.msra.mxu0 0.0
        %320 = vmatprep.subr.mxu0 0.0
        %321 = vmatpush1.msra.mxu0 0.0
        %322 = vmatprep.subr.mxu0 0.0
        %323 = vmatpush1.msra.mxu0 0.0
        %324 = vmatprep.subr.mxu0 0.0
        %325 = vmatpush1.msra.mxu0 0.0
        %326 = vmatprep.subr.mxu0 0.0
        %327 = vmatpush1.msra.mxu0 0.0
        %328 = vmatprep.subr.mxu0 0.0
        %329 = vmatpush1.msra.mxu0 0.0
        %330 = vmatprep.subr.mxu0 0.0
        %331 = vmatpush1.msra.mxu0 0.0
        %332 = vmatprep.subr.mxu0 0.0
        %333 = vmatpush1.msra.mxu0 0.0
        %334 = vmatprep.subr.mxu0 0.0
        %335 = vmatpush1.msra.mxu0 0.0
        %336 = vmatprep.mubr.f32.mxu0 0.0
        %337 = vmatmul.mubr.f32.gmra.mrb[0].mxu0 %v260
        %v338 = vpop.f32.mrb[0].mxu0
        %v339 = vadd.f32 0.0, %v338
        %v340 = vpop.f32.mrb[0].mxu0
        %v341 = vadd.f32 0.0, %v340
        %342 = vmatprep.mubr.f32.mxu0 0.0
        %343 = vmatmul.mubr.f32.gmra.mrb[0].mxu0 %v263
        %v344 = vpop.f32.mrb[0].mxu0
        %v345 = vadd.f32 0.0, %v344
        %v346 = vpop.f32.mrb[0].mxu0
        %v347 = vadd.f32 0.0, %v346
        %348 = vdwg.mxu0
        %vm349 = vcmask 97280
        %v351 = vsel %vm349, %v248, 0
        %v354 = vsel %vm349, %v249, 0
        %vm356 = vcmask 1043456
        %v358 = vsel %vm356, %v254, 0
        %v361 = vsel %vm356, %v255, 0
        %363 = vmatprep.subr.mxu0 %v253
        %364 = vmatpush1.msra.mxu0 %v252
        %365 = vmatprep.subr.mxu0 %v361
        %366 = vmatpush1.msra.mxu0 %v358
        %367 = vmatprep.subr.mxu0 0.0
        %368 = vmatpush1.msra.mxu0 0.0
        %369 = vmatprep.subr.mxu0 0.0
        %370 = vmatpush1.msra.mxu0 0.0
        %371 = vmatprep.subr.mxu0 0.0
        %372 = vmatpush1.msra.mxu0 0.0
        %373 = vmatprep.subr.mxu0 0.0
        %374 = vmatpush1.msra.mxu0 0.0
        %375 = vmatprep.subr.mxu0 0.0
        %376 = vmatpush1.msra.mxu0 0.0
        %377 = vmatprep.subr.mxu0 0.0
        %378 = vmatpush1.msra.mxu0 0.0
        %379 = vmatprep.subr.mxu0 0.0
        %380 = vmatpush1.msra.mxu0 0.0
        %381 = vmatprep.subr.mxu0 0.0
        %382 = vmatpush1.msra.mxu0 0.0
        %383 = vmatprep.subr.mxu0 0.0
        %384 = vmatpush1.msra.mxu0 0.0
        %385 = vmatprep.subr.mxu0 0.0
        %386 = vmatpush1.msra.mxu0 0.0
        %387 = vmatprep.subr.mxu0 0.0
        %388 = vmatpush1.msra.mxu0 0.0
        %389 = vmatprep.subr.mxu0 0.0
        %390 = vmatpush1.msra.mxu0 0.0
        %391 = vmatprep.subr.mxu0 0.0
        %392 = vmatpush1.msra.mxu0 0.0
        %393 = vmatprep.subr.mxu0 0.0
        %394 = vmatpush1.msra.mxu0 0.0
        %395 = vmatprep.subr.mxu0 0.0
        %396 = vmatpush1.msra.mxu0 0.0
        %397 = vmatprep.subr.mxu0 0.0
        %398 = vmatpush1.msra.mxu0 0.0
        %399 = vmatprep.subr.mxu0 0.0
        %400 = vmatpush1.msra.mxu0 0.0
        %401 = vmatprep.subr.mxu0 0.0
        %402 = vmatpush1.msra.mxu0 0.0
        %403 = vmatprep.subr.mxu0 0.0
        %404 = vmatpush1.msra.mxu0 0.0
        %405 = vmatprep.subr.mxu0 0.0
        %406 = vmatpush1.msra.mxu0 0.0
        %407 = vmatprep.subr.mxu0 0.0
        %408 = vmatpush1.msra.mxu0 0.0
        %409 = vmatprep.subr.mxu0 0.0
        %410 = vmatpush1.msra.mxu0 0.0
        %411 = vmatprep.subr.mxu0 0.0
        %412 = vmatpush1.msra.mxu0 0.0
        %413 = vmatprep.subr.mxu0 0.0
        %414 = vmatpush1.msra.mxu0 0.0
        %415 = vmatprep.subr.mxu0 0.0
        %416 = vmatpush1.msra.mxu0 0.0
        %417 = vmatprep.subr.mxu0 0.0
        %418 = vmatpush1.msra.mxu0 0.0
        %419 = vmatprep.subr.mxu0 0.0
        %420 = vmatpush1.msra.mxu0 0.0
        %421 = vmatprep.subr.mxu0 0.0
        %422 = vmatpush1.msra.mxu0 0.0
        %423 = vmatprep.subr.mxu0 0.0
        %424 = vmatpush1.msra.mxu0 0.0
        %425 = vmatprep.subr.mxu0 0.0
        %426 = vmatpush1.msra.mxu0 0.0
        %427 = vmatprep.mubr.f32.mxu0 0.0
        %428 = vmatmul.mubr.f32.gmra.mrb[0].mxu0 %v351
        %v429 = vpop.f32.mrb[0].mxu0
        %v430 = vadd.f32 %v339, %v429
        %v431 = vpop.f32.mrb[0].mxu0
        %v432 = vadd.f32 %v341, %v431
        %433 = vmatprep.mubr.f32.mxu0 0.0
        %434 = vmatmul.mubr.f32.gmra.mrb[0].mxu0 %v354
        %v435 = vpop.f32.mrb[0].mxu0
        %v436 = vadd.f32 %v345, %v435
        %v437 = vpop.f32.mrb[0].mxu0
        %v438 = vadd.f32 %v347, %v437
        %439 = vdwg.mxu0
        %v440 = vld [vmem:[%s4] sm:$0x3]
        %v442 = vlaneseq
        %v443 = vshrl.u32 %v442, 7
        %v444 = vsub.s32 0, %v443
        %v445 = vrot.slane %v440, %v444
        %v446 = vlaneseq
        %v447 = vshrl.u32 %v446, 7
        %v448 = vsub.s32 1, %v447
        %v449 = vrot.slane %v440, %v448
        %v452 = vadd.f32 %v430, %v445
        %v453 = vadd.f32 %v432, %v449
        %v454 = vadd.f32 %v436, %v445
        %v455 = vadd.f32 %v438, %v449
        %456 = vst [vmem:[%s234] sm:$0xff] %v452
        %vm457 = vcmask 130048
        %458 = vst.msk [vmem:[%s234 + $0x8] sm:$0xff] %vm457, %v453
        %459 = vst [vmem:[%s234 + $0x10] sm:$0xff] %v454
        %460 = vst.msk [vmem:[%s234 + $0x18] sm:$0xff] %vm457, %v455
        %s461 = sand.u32 %s142, 1
        %s462 = scalar_lea.sflag [#allocation3], %s461
        %s463 = sand.u32 %s142, 1
        %s464 = smul.addr %s463, 32
        %s465 = scalar_lea.vmem [#allocation2], %s464
        // Predicated region
        $region41: #{tpu_custom_call.1} parent=39 // pred_check
          %p466 = pneg %p152
        $region42: #{tpu_custom_call.1} parent=39 // pred_check_branch
          %468 = sbr.rel (%p466) target = $region44
        $region43: #{tpu_custom_call.1} parent=39 // pred_region
          %s469 = smul.u32 2, %s19
          %s471 = ssub.s32 512, 512
          %472 = vsyncadd %s462, %s471
          %s473 = smul.addr %s469, 2
          %s474 = smul.addr %s473, 128
          %s475 = scalar_lea.hbm %s5, %s474
          %s476 = sshll.u32 %s465, 4
          %s477 = int_to_ptr.vmem [resolvable:$true] %s476
          %482 = dma.vmem_to_hbm [thread:$0]  %s477, 512, %s475, %s462, 256, 256, 16
        $region44: #{tpu_custom_call.1} parent=39 // pred_fallthru
          _
      $region40: #{tpu_custom_call.1} parent=5 // pred_fallthru
        _
      %p483 = scmp.le.s32.totalorder 2, %s14
      // Predicated region
      $region45: #{tpu_custom_call.1} parent=5 // pred_check
        %p484 = pneg %p483
      $region46: #{tpu_custom_call.1} parent=5 // pred_check_branch
        %486 = sbr.rel (%p484) target = $region48
      $region47: #{tpu_custom_call.1} parent=5 // pred_region
        %s487 = ssub.s32 %s14, 2
        // Predicated region
        $region49: #{tpu_custom_call.1} parent=47 // pred_check
          %p488 = pneg %p158
        $region50: #{tpu_custom_call.1} parent=47 // pred_check_branch
          %490 = sbr.rel (%p488) target = $region52
        $region51: #{tpu_custom_call.1} parent=47 // pred_region
          %s491 = sand.u32 %s143, 1
          %s492 = scalar_lea.sflag [#allocation3], %s491
          %s493 = sand.u32 %s143, 1
          %s494 = smul.addr %s493, 32
          %s495 = scalar_lea.vmem [#allocation2], %s494
          %496 = dma.done %s492, 512
        $region52: #{tpu_custom_call.1} parent=47 // pred_fallthru
          _
      $region48: #{tpu_custom_call.1} parent=5 // pred_fallthru
        _
    $region6: #{tpu_custom_call.1} parent=1 // loop_footer
      %s18 = sadd.s32 1, %s14
    $region7: #{tpu_custom_call.1} parent=1 // loop_footer_branch
      %13 = sbr.rel target = $region3
    $region8: #{tpu_custom_call.1} parent=1 // loop_exit
      _
    %497 = vsyncpa [#allocation3], 1
    %s498 = scalar_lea.sflag [#allocation3], 1
    %499 = vsyncpa %s498, 1

</llo_original>
